<compile_context>
chip_gen: v6e
topology: v6e:2x2x1
jax: 0.10.0
libtpu: 0.0.40
codegen_flags: <defaults>
</compile_context>

<pallas_src>
import math

import jax
import jax.numpy as jnp
from jax.experimental import pallas as pl
from jax.experimental.pallas import tpu as pltpu


def _round_up(x, m):
    return ((x + m - 1) // m) * m


def _make_spp_kernel(levels, H, W):
    """Build a kernel computing every pyramid level from one channels-last block.

    levels: list of (win, stride, pad, oh, ow, cell_offset).
    """

    def kernel(x_ref, o_ref):
        # x_ref: (TB, H, W, TC)      -- channels on the lane axis (dense vregs).
        # o_ref: (TB, S_total, TC)   -- lane-dense output, one row per pooled cell.
        for (win, stride, pad, oh, ow, off) in levels:
            for i in range(oh):
                # Static clamp == -inf padding semantics for max-pool.
                h0 = max(0, i * stride - pad)
                h1 = min(H, i * stride - pad + win)
                # H reduction: elementwise (VPU) max across whole (W, C) slabs,
                # hoisted out of the j loop and reused by all W windows.
                row = jnp.max(x_ref[:, h0:h1, :, :], axis=1)        # (TB, W, TC)
                for j in range(ow):
                    w0 = max(0, j * stride - pad)
                    w1 = min(W, j * stride - pad + win)
                    cell = jnp.max(row[:, w0:w1, :], axis=1)         # (TB, TC)
                    idx = off + i * ow + j
                    # Direct lane-dense store of this pooled cell (no concat
                    # assembly, no lane-sparse masked stores).
                    o_ref[:, idx:idx + 1, :] = cell[:, None, :]

    return kernel


class SPPModulePallas:
    """JAX/Pallas port of the PyTorch SPPModule (no learned parameters)."""

    def __init__(self, conv5_dim=13, bins=(1,)):
        self.bins = list(bins)
        self.n = conv5_dim
        # NOTE: faithful to the PyTorch original, which hardcodes 256 channels
        # in this metadata; it is not used by the forward pass.
        self.output_dim = 0
        self.levels = []  # (win, stride, pad, oh, ow, cell_offset)
        off = 0
        for b in self.bins:
            self.output_dim += b * b * 256
            win = int(math.ceil(self.n / b))
            stride = int(math.floor(self.n / b))
            pad = 0
            if self.n == 10 and b == 6:
                pad = 1
                stride += 1
            # PyTorch MaxPool2d output size (floor mode, dilation=1)
            out_sz = (self.n + 2 * pad - win) // stride + 1
            self.levels.append((win, stride, pad, out_sz, out_sz, off))
            off += out_sz * out_sz
        self.total_cells = off

    def get_output_dim(self):
        return self.output_dim

    def __call__(self, x_nchw):
        # x_nchw: (B, C, H, W) -- same layout convention as the PyTorch module.
        B, C, H, W = x_nchw.shape
        assert H == self.n and W == self.n, "spatial dims must equal conv5_dim"

        # One-time tiny transpose to channels-last: C on the lane axis.
        x_cl = jnp.transpose(x_nchw, (0, 2, 3, 1))                 # (B, H, W, C)

        itemsize = jnp.dtype(x_nchw.dtype).itemsize
        LANE = 128
        SUB = {4: 8, 2: 16, 1: 32}.get(itemsize, 8)                # sublane pack
        S = self.total_cells

        # Channel tile: full C when it fits one lane group, else 128-lane tiles.
        tc = C if C <= LANE else LANE

        # Padded VMEM bytes per batch element for input / fused-output blocks.
        pb_in = H * _round_up(W, SUB) * _round_up(tc, LANE) * itemsize
        pb_out = _round_up(S, SUB) * _round_up(tc, LANE) * itemsize
        # Budget: input block <= ~2 MiB, double-buffered (in + out) <= ~12 MiB.
        tb = min(B,
                 max(1, (2 * 1024 * 1024) // pb_in),
                 max(1, (6 * 1024 * 1024) // (pb_in + pb_out)))
        # Megacore / pipelining: make sure the grid has >= 2 steps when possible.
        if pl.cdiv(C, tc) == 1 and B > 1:
            tb = min(tb, (B + 1) // 2)

        grid = (pl.cdiv(B, tb), pl.cdiv(C, tc))
        kernel = _make_spp_kernel(self.levels, H, W)

        out = pl.pallas_call(
            kernel,
            out_shape=jax.ShapeDtypeStruct((B, S, C), x_nchw.dtype),
            grid=grid,
            in_specs=[pl.BlockSpec((tb, H, W, tc), lambda bi, ci: (bi, 0, 0, ci))],
            out_specs=pl.BlockSpec((tb, S, tc), lambda bi, ci: (bi, 0, ci)),
            compiler_params=pltpu.CompilerParams(
                dimension_semantics=("parallel", "parallel")),
        )(x_cl)                                                     # (B, S, C)

        # Reorder to PyTorch's per-level (c, oh, ow) flatten order. Pure glue on
        # a (B, <=50, C) array -> negligible vs. the HBM read of the activation.
        pieces = []
        for (_, _, _, oh, ow, off) in self.levels:
            lv = out[:, off:off + oh * ow, :]                       # (B, oh*ow, C)
            pieces.append(jnp.transpose(lv, (0, 2, 1)).reshape(B, C * oh * ow))
        return jnp.concatenate(pieces, axis=1)


def _reference(x_nchw, levels):
    """Plain-JAX reference (reduce_window) for correctness checking."""
    outs = []
    B = x_nchw.shape[0]
    neg_inf = jnp.array(-jnp.inf, dtype=x_nchw.dtype)
    for (win, stride, pad, _, _, _) in levels:
        pooled = jax.lax.reduce_window(
            x_nchw, neg_inf, jax.lax.max,
            window_dimensions=(1, 1, win, win),
            window_strides=(1, 1, stride, stride),
            padding=((0, 0), (0, 0), (pad, pad), (pad, pad)),
        )
        outs.append(pooled.reshape(B, -1))
    return jnp.concatenate(outs, axis=1)


if __name__ == "__main__":
    key = jax.random.PRNGKey(0)
    k1, k2, k3, k4 = jax.random.split(key, 4)

    # 1) Module defaults: conv5_dim=13, bins=[1].
    x1 = jax.random.normal(k1, (2, 4, 13, 13), dtype=jnp.float32)
    spp1 = SPPModulePallas(conv5_dim=13, bins=[1])
    out1 = jax.block_until_ready(spp1(x1))
    ref1 = _reference(x1, spp1.levels)
    assert out1.shape == (2, 4 * sum(b * b for b in spp1.bins)), out1.shape
    assert jnp.array_equal(out1, ref1), "mismatch vs reference (bins=[1])"

    # 2) Full pyramid, all levels fused into ONE pallas_call / ONE output array.
    x2 = jax.random.normal(k2, (2, 8, 13, 13), dtype=jnp.float32)
    spp2 = SPPModulePallas(conv5_dim=13, bins=[6, 3, 2, 1])
    out2 = jax.block_until_ready(spp2(x2))
    ref2 = _reference(x2, spp2.levels)
    assert out2.shape == (2, 8 * sum(b * b for b in spp2.bins)), out2.shape
    assert jnp.array_equal(out2, ref2), "mismatch vs reference (full pyramid)"

    # 3) Padding corner case (n == 10, bin == 6 -> pad = 1), clamped in-kernel.
    x3 = jax.random.normal(k3, (2, 4, 10, 10), dtype=jnp.float32)
    spp3 = SPPModulePallas(conv5_dim=10, bins=[6])
    out3 = jax.block_until_ready(spp3(x3))
    ref3 = _reference(x3, spp3.levels)
    assert out3.shape == (2, 4 * 36), out3.shape
    assert jnp.array_equal(out3, ref3), "mismatch vs reference (pad=1 case)"

    # 4) Real channel count (C=256 -> channel-tiled grid axis) + bf16 input.
    x4 = jax.random.normal(k4, (2, 256, 13, 13), dtype=jnp.float32).astype(jnp.bfloat16)
    spp4 = SPPModulePallas(conv5_dim=13, bins=[6, 3, 2, 1])
    out4 = jax.block_until_ready(spp4(x4))
    ref4 = _reference(x4, spp4.levels)
    assert out4.shape == (2, 256 * sum(b * b for b in spp4.bins)), out4.shape
    assert jnp.array_equal(out4, ref4), "mismatch vs reference (C=256 bf16)"

    print("KERNEL_OK")
</pallas_src>

<mosaic_0001>
module attributes {stable_mosaic.version = 11 : i64} {
  func.func @kernel(%arg0: i32, %arg1: i32, %arg2: memref<1x13x13x4xf32, #tpu.memory_space<vmem>>, %arg3: memref<1x1x4xf32, #tpu.memory_space<vmem>>) attributes {dimension_semantics = [#tpu.dimension_semantics<parallel>, #tpu.dimension_semantics<parallel>], iteration_bounds = array<i64: 2, 1>, scalar_prefetch = 0 : i64, scratch_operands = 0 : i64, tpu.core_type = #tpu.core_type<tc>, window_params = [{transform_indices = @transform_0, window_bounds = array<i64: 1, 13, 13, 4>}, {transform_indices = @transform_1, window_bounds = array<i64: 1, 1, 4>}]} {
    %c0 = arith.constant 0 : index
    %c0_0 = arith.constant 0 : index
    %c0_1 = arith.constant 0 : index
    %c0_2 = arith.constant 0 : index
    %0 = vector.load %arg2[%c0, %c0_0, %c0_1, %c0_2] : memref<1x13x13x4xf32, #tpu.memory_space<vmem>>, vector<1x13x13x4xf32>
    %cst = arith.constant dense<0xFF800000> : vector<1x13x4xf32>
    %1 = vector.multi_reduction <maximumf>, %0, %cst [1] : vector<1x13x13x4xf32> to vector<1x13x4xf32>
    %cst_3 = arith.constant dense<0xFF800000> : vector<1x4xf32>
    %2 = vector.multi_reduction <maximumf>, %1, %cst_3 [1] : vector<1x13x4xf32> to vector<1x4xf32>
    %3 = vector.shape_cast %2 : vector<1x4xf32> to vector<1x1x4xf32>
    %c0_4 = arith.constant 0 : index
    %c0_5 = arith.constant 0 : index
    %c0_6 = arith.constant 0 : index
    %4 = vector.load %arg3[%c0_4, %c0_5, %c0_6] : memref<1x1x4xf32, #tpu.memory_space<vmem>>, vector<1x1x4xf32>
    tpu.vector_store %arg3[%c0_4, %c0_5, %c0_6], %3 {strides = array<i32>} : memref<1x1x4xf32, #tpu.memory_space<vmem>>, vector<1x1x4xf32>,
    return
  }
  func.func @transform_0(%arg0: i32, %arg1: i32) -> (i32, i32, i32, i32) {
    %c0_i32 = arith.constant 0 : i32
    %c0_i32_0 = arith.constant 0 : i32
    %c0_i32_1 = arith.constant 0 : i32
    return %arg0, %c0_i32, %c0_i32_0, %arg1 : i32, i32, i32, i32
  }
  func.func @transform_1(%arg0: i32, %arg1: i32) -> (i32, i32, i32) {
    %c0_i32 = arith.constant 0 : i32
    %c0_i32_0 = arith.constant 0 : i32
    return %arg0, %c0_i32, %arg1 : i32, i32, i32
  }
}

</mosaic_0001>

<llo_original>
// kernel: tpu_custom_call.1
$region0: #{tpu_custom_call.1}
  #allocation0 [shape = 'u32[]', space=smem, size = 0x4, offset = 0x4, fixed_abs, tag = 'smem constant byte address 0x4 - core index']
  #allocation1 [shape = 'u32[144,128]{1,0:T(1,128)}', space=vmem, size = 0x12000, scoped, tag = 'internal scratch']
  %s0 = inlined_call_operand.vmem [shape: f32[2,13,13,4], index: 0, kind: input, shape index: {}]
  %s1 = inlined_call_operand.hbm [shape: f32[2,1,4], index: 1, kind: output, shape index: {}]
  %s2 = sld [smem:[#allocation0]]
  $region37: #{tpu_custom_call.1} parent=0
    _
  %s4 = ssub.s32 1, %s2
  %s5 = scalar_select 0, %s4, %s2
  $region1: #{tpu_custom_call.1} parent=0
    #allocation2 [shape = 'u8[1024]{0}', space=vmem, size = 0x400, scoped, tag = 'output window, operand 0']
    #allocation3 [shape = 's32[2]{0}', space=sflag, size = 0x8, scoped, tag = 'scoped memory for tpu_custom_call.1']
    %6 = vsyncpa [#allocation3], 0
    %s7 = scalar_lea.sflag [#allocation3], 1
    %8 = vsyncpa %s7, 0
    loop: start=0, step=1, limit=4
    $region2: #{tpu_custom_call.1} parent=1 // loop_pre_header
      _
    $region3: #{tpu_custom_call.1} parent=1 // loop_header
      %s10 = sphi 0, %s14
      %p11 = scmp.ge.s32.totalorder %s10, 4
      %s17 = sphi 0, %s29
      %s18 = sphi 0, %s25
      %s19 = sphi 0, %s17
      %s20 = sphi 0, %s18
      %s21 = sphi 0, %s19
      %s22 = sphi 0, %s20
      %s34 = sphi 0, %s36
      %s37 = sphi 0, %s34
      %s38 = sphi 0, %s37
      %s54 = sphi 0, %s38
      %s62 = sphi 0, %s64
      %s65 = sphi 0, %s62
      %s66 = sphi 0, %s65
      %s82 = sphi 0, %s66
    $region4: #{tpu_custom_call.1} parent=1 // loop_header_branch
      %13 = sbr.rel (%p11) target = $region8
    $region5: #{tpu_custom_call.1} parent=1 // loop_body
      %s15 = ssub.s32 %s10, 1
      %s16 = ssub.s32 %s10, 2
      %s23 = sadd.s32 1, %s18
      %p24 = scmp.ge.s32.totalorder %s23, 1
      %s25 = scalar_select %p24, 0, %s23
      %s26 = sadd.s32 1, %s17
      %s27 = scalar_select %p24, %s26, %s17
      %p28 = scmp.ge.s32.totalorder %s27, 2
      %s29 = scalar_select %p28, 0, %s27
      %s30 = ssub.s32 %s17, %s29
      %s31 = ssub.s32 %s18, %s25
      %s32 = sor.u32 %s30, %s31
      %p33 = scmp.eq.s32.totalorder %s32, 0
      %s35 = sadd.s32 %s34, 1
      %s36 = scalar_select %p33, %s34, %s35
      %p39 = pneg %p33
      %p40 = scmp.eq.s32.totalorder %s10, 1
      %p41 = por %p39, %p40
      %p42 = scmp.ne.s32.totalorder %s34, %s37
      %p43 = scmp.eq.s32.totalorder %s10, 0
      %p44 = por %p42, %p43
      %p45 = scmp.ne.s32.totalorder %s34, %s37
      %p46 = scmp.eq.s32.totalorder %s15, 1
      %p47 = por %p45, %p46
      %p48 = scmp.ne.s32.totalorder %s37, %s38
      %p49 = scmp.eq.s32.totalorder %s15, 0
      %p50 = por %p48, %p49
      %p51 = scmp.ne.s32.totalorder %s37, %s38
      %p52 = scmp.eq.s32.totalorder %s16, 1
      %p53 = por %p51, %p52
      %p55 = scmp.ne.s32.totalorder %s38, %s54
      %p56 = scmp.eq.s32.totalorder %s16, 0
      %p57 = por %p55, %p56
      %s58 = ssub.s32 %s17, %s29
      %s59 = ssub.s32 %s18, %s25
      %s60 = sor.u32 %s58, %s59
      %p61 = scmp.eq.s32.totalorder %s60, 0
      %s63 = sadd.s32 %s62, 1
      %s64 = scalar_select %p61, %s62, %s63
      %p67 = pneg %p61
      %p68 = scmp.eq.s32.totalorder %s10, 1
      %p69 = por %p67, %p68
      %p70 = scmp.ne.s32.totalorder %s62, %s65
      %p71 = scmp.eq.s32.totalorder %s10, 0
      %p72 = por %p70, %p71
      %p73 = scmp.ne.s32.totalorder %s62, %s65
      %p74 = scmp.eq.s32.totalorder %s15, 1
      %p75 = por %p73, %p74
      %p76 = scmp.ne.s32.totalorder %s65, %s66
      %p77 = scmp.eq.s32.totalorder %s15, 0
      %p78 = por %p76, %p77
      %p79 = scmp.ne.s32.totalorder %s65, %s66
      %p80 = scmp.eq.s32.totalorder %s16, 1
      %p81 = por %p79, %p80
      %p83 = scmp.ne.s32.totalorder %s66, %s82
      %p84 = scmp.eq.s32.totalorder %s16, 0
      %p85 = por %p83, %p84
      %p86 = scmp.le.s32.totalorder 1, %s10
      %p87 = scmp.lt.s32.totalorder %s10, 3
      %p88 = pnand %p86, %p87
      %p89 = pneg %p88
      // Predicated region
      $region9: #{tpu_custom_call.1} parent=5 // pred_check
        _
      $region10: #{tpu_custom_call.1} parent=5 // pred_check_branch
        %91 = sbr.rel (%p88) target = $region12
      $region11: #{tpu_custom_call.1} parent=5 // pred_region
        %s92 = ssub.s32 %s10, 1
      $region12: #{tpu_custom_call.1} parent=5 // pred_fallthru
        _
      %p93 = scmp.lt.s32.totalorder %s10, 2
      // Predicated region
      $region13: #{tpu_custom_call.1} parent=5 // pred_check
        %p94 = pneg %p93
      $region14: #{tpu_custom_call.1} parent=5 // pred_check_branch
        %96 = sbr.rel (%p94) target = $region16
      $region15: #{tpu_custom_call.1} parent=5 // pred_region
        // Predicated region
        $region17: #{tpu_custom_call.1} parent=15 // pred_check
          %p97 = pneg %p44
        $region18: #{tpu_custom_call.1} parent=15 // pred_check_branch
          %99 = sbr.rel (%p97) target = $region20
        $region19: #{tpu_custom_call.1} parent=15 // pred_region
          %p100 = scmp.lt.s32.totalorder %s17, 1
          %s101 = scalar_select %p100, %s17, 1
          %p102 = scmp.lt.s32.totalorder %s18, 0
          %s103 = scalar_select %p102, %s18, 0
          %s104 = smul.addr %s101, 26
          %s105 = sadd.s32 %s103, %s104
          %s106 = smul.addr %s105, 8
          %s107 = scalar_lea.vmem %s0, %s106
        $region20: #{tpu_custom_call.1} parent=15 // pred_fallthru
          _
      $region16: #{tpu_custom_call.1} parent=5 // pred_fallthru
        _
      %p108 = scmp.le.s32.totalorder 1, %s10
      %p109 = scmp.lt.s32.totalorder %s10, 3
      %p110 = pnand %p108, %p109
      %p111 = pneg %p110
      // Predicated region
      $region21: #{tpu_custom_call.1} parent=5 // pred_check
        _
      $region22: #{tpu_custom_call.1} parent=5 // pred_check_branch
        %113 = sbr.rel (%p110) target = $region24
      $region23: #{tpu_custom_call.1} parent=5 // pred_region
        %s114 = ssub.s32 %s10, 1
        %p115 = scmp.lt.s32.totalorder %s19, 1
        %s116 = scalar_select %p115, %s19, 1
        %p117 = scmp.lt.s32.totalorder %s20, 0
        %s118 = scalar_select %p117, %s20, 0
        %s119 = smul.addr %s116, 26
        %s120 = sadd.s32 %s118, %s119
        %s121 = smul.addr %s120, 8
        %s122 = scalar_lea.vmem %s0, %s121
        %p123 = pneg %p50
        %p124 = pneg %p47
        %p125 = pneg %p78
        %p126 = pneg %p75
        %s127 = sand.u32 %s65, 1
        %s128 = scalar_lea.sflag [#allocation3], %s127
        %s129 = sand.u32 %s65, 1
        %s130 = scalar_lea.vmem [#allocation2], %s129
        %p131 = scmp.lt.s32.totalorder %s19, 1
        %s132 = scalar_select %p131, %s19, 1
        %p133 = scmp.lt.s32.totalorder %s20, 0
        %s134 = scalar_select %p133, %s20, 0
        %s135 = smul.addr %s132, 26
        %s136 = sadd.s32 %s134, %s135
        %s137 = smul.addr %s136, 8
        %s138 = scalar_lea.vmem %s0, %s137
        %v139 = vld [vmem:[%s138] sm:$0xff]
        %v140 = vld [vmem:[%s138 + $0x8] sm:$0x1f]
        %v141 = vld [vmem:[%s138 + $0x10] sm:$0xff]
        %v142 = vld [vmem:[%s138 + $0x18] sm:$0x1f]
        %v143 = vld [vmem:[%s138 + $0x20] sm:$0xff]
        %v144 = vld [vmem:[%s138 + $0x28] sm:$0x1f]
        %v145 = vld [vmem:[%s138 + $0x30] sm:$0xff]
        %v146 = vld [vmem:[%s138 + $0x38] sm:$0x1f]
        %v147 = vld [vmem:[%s138 + $0x40] sm:$0xff]
        %v148 = vld [vmem:[%s138 + $0x48] sm:$0x1f]
        %v149 = vld [vmem:[%s138 + $0x50] sm:$0xff]
        %v150 = vld [vmem:[%s138 + $0x58] sm:$0x1f]
        %v151 = vld [vmem:[%s138 + $0x60] sm:$0xff]
        %v152 = vld [vmem:[%s138 + $0x68] sm:$0x1f]
        %v153 = vld [vmem:[%s138 + $0x70] sm:$0xff]
        %v154 = vld [vmem:[%s138 + $0x78] sm:$0x1f]
        %v155 = vld [vmem:[%s138 + $0x80] sm:$0xff]
        %v156 = vld [vmem:[%s138 + $0x88] sm:$0x1f]
        %v157 = vld [vmem:[%s138 + $0x90] sm:$0xff]
        %v158 = vld [vmem:[%s138 + $0x98] sm:$0x1f]
        %v159 = vld [vmem:[%s138 + $0xa0] sm:$0xff]
        %v160 = vld [vmem:[%s138 + $0xa8] sm:$0x1f]
        %v161 = vld [vmem:[%s138 + $0xb0] sm:$0xff]
        %v162 = vld [vmem:[%s138 + $0xb8] sm:$0x1f]
        %v163 = vld [vmem:[%s138 + $0xc0] sm:$0xff]
        %v164 = vld [vmem:[%s138 + $0xc8] sm:$0x1f]
        %vm165 = vcmask 31744
        %v166 = vsel %vm165, %v139, -inf
        %v167 = vsel %vm165, %v141, -inf
        %v168 = vsel %vm165, %v143, -inf
        %v169 = vmax.f32 %v166, %v168
        %v170 = vsel %vm165, %v145, -inf
        %v171 = vmax.f32 %v167, %v170
        %v172 = vsel %vm165, %v147, -inf
        %v173 = vmax.f32 %v169, %v172
        %v174 = vsel %vm165, %v149, -inf
        %v175 = vmax.f32 %v171, %v174
        %v176 = vsel %vm165, %v151, -inf
        %v177 = vmax.f32 %v173, %v176
        %v178 = vsel %vm165, %v153, -inf
        %v179 = vmax.f32 %v175, %v178
        %v180 = vsel %vm165, %v155, -inf
        %v181 = vmax.f32 %v177, %v180
        %v182 = vsel %vm165, %v157, -inf
        %v183 = vmax.f32 %v179, %v182
        %v184 = vsel %vm165, %v159, -inf
        %v185 = vmax.f32 %v181, %v184
        %v186 = vsel %vm165, %v161, -inf
        %v187 = vmax.f32 %v183, %v186
        %v188 = vsel %vm165, %v163, -inf
        %v189 = vmax.f32 %v185, %v188
        %v190 = vmax.f32 %v189, %v187
        %vm191 = vcmask 28672
        %v192 = vsel %vm191, %v140, -inf
        %v193 = vsel %vm191, %v142, -inf
        %v194 = vsel %vm191, %v144, -inf
        %v195 = vmax.f32 %v192, %v194
        %v196 = vsel %vm191, %v146, -inf
        %v197 = vmax.f32 %v193, %v196
        %v198 = vsel %vm191, %v148, -inf
        %v199 = vmax.f32 %v195, %v198
        %v200 = vsel %vm191, %v150, -inf
        %v201 = vmax.f32 %v197, %v200
        %v202 = vsel %vm191, %v152, -inf
        %v203 = vmax.f32 %v199, %v202
        %v204 = vsel %vm191, %v154, -inf
        %v205 = vmax.f32 %v201, %v204
        %v206 = vsel %vm191, %v156, -inf
        %v207 = vmax.f32 %v203, %v206
        %v208 = vsel %vm191, %v158, -inf
        %v209 = vmax.f32 %v205, %v208
        %v210 = vsel %vm191, %v160, -inf
        %v211 = vmax.f32 %v207, %v210
        %v212 = vsel %vm191, %v162, -inf
        %v213 = vmax.f32 %v209, %v212
        %v214 = vsel %vm191, %v164, -inf
        %v215 = vmax.f32 %v211, %v214
        %v216 = vmax.f32 %v215, %v213
        %v217 = vsel %vm165, %v190, -inf
        %v218 = vsel %vm191, %v216, -inf
        %v219 = vmax.f32 %v217, %v218
        %v220 = vrot.slane %v219, 4
        %v221 = vmax.f32 %v219, %v220
        %v222 = vrot.slane %v221, 2
        %v223 = vmax.f32 %v221, %v222
        %v224 = vrot.slane %v223, 1
        %v225 = vmax.f32 %v223, %v224
        %vm226 = vcmask 24576
        %227 = vst.msk [vmem:[%s130] sm:$0x1] %vm226, %v225
        %s228 = sand.u32 %s65, 1
        %s229 = scalar_lea.sflag [#allocation3], %s228
        %s230 = sand.u32 %s65, 1
        %s231 = scalar_lea.vmem [#allocation2], %s230
        // Predicated region
        $region25: #{tpu_custom_call.1} parent=23 // pred_check
          %p232 = pneg %p75
        $region26: #{tpu_custom_call.1} parent=23 // pred_check_branch
          %234 = sbr.rel (%p232) target = $region28
        $region27: #{tpu_custom_call.1} parent=23 // pred_region
          %s236 = ssub.s32 16, 16
          %237 = vsyncadd %s229, %s236
          %s238 = sadd.s32 %s20, %s19
          %s239 = smul.addr %s238, 16
          %s240 = scalar_lea.hbm %s1, %s239
          %s242 = sshll.u32 %s231, 4
          %s243 = int_to_ptr.vmem [resolvable:$true] %s242
          %245 = dma.vmem_to_hbm [thread:$0]  %s243, 16, %s240, %s229
        $region28: #{tpu_custom_call.1} parent=23 // pred_fallthru
          _
      $region24: #{tpu_custom_call.1} parent=5 // pred_fallthru
        _
      %p246 = scmp.le.s32.totalorder 2, %s10
      // Predicated region
      $region29: #{tpu_custom_call.1} parent=5 // pred_check
        %p247 = pneg %p246
      $region30: #{tpu_custom_call.1} parent=5 // pred_check_branch
        %249 = sbr.rel (%p247) target = $region32
      $region31: #{tpu_custom_call.1} parent=5 // pred_region
        %s250 = ssub.s32 %s10, 2
        // Predicated region
        $region33: #{tpu_custom_call.1} parent=31 // pred_check
          %p251 = pneg %p81
        $region34: #{tpu_custom_call.1} parent=31 // pred_check_branch
          %253 = sbr.rel (%p251) target = $region36
        $region35: #{tpu_custom_call.1} parent=31 // pred_region
          %s254 = sand.u32 %s66, 1
          %s255 = scalar_lea.sflag [#allocation3], %s254
          %s256 = sand.u32 %s66, 1
          %s257 = scalar_lea.vmem [#allocation2], %s256
          %258 = dma.done %s255, 16
        $region36: #{tpu_custom_call.1} parent=31 // pred_fallthru
          _
      $region32: #{tpu_custom_call.1} parent=5 // pred_fallthru
        _
    $region6: #{tpu_custom_call.1} parent=1 // loop_footer
      %s14 = sadd.s32 1, %s10
    $region7: #{tpu_custom_call.1} parent=1 // loop_footer_branch
      %9 = sbr.rel target = $region3
    $region8: #{tpu_custom_call.1} parent=1 // loop_exit
      _
    %259 = vsyncpa [#allocation3], 1
    %s260 = scalar_lea.sflag [#allocation3], 1
    %261 = vsyncpa %s260, 1

</llo_original>
